<compile_context>
chip_gen: v7x
topology: tpu7x:2x2x1
jax: 0.10.0
libtpu: 0.0.40
codegen_flags: <defaults>
</compile_context>

<pallas_src>
import functools

import jax
import jax.numpy as jnp
from jax.experimental import pallas as pl
from jax.experimental.pallas import tpu as pltpu

_LANE = 128

_ACTS = {
    "relu": lambda x: jnp.maximum(x, 0.0),
    "tanh": jnp.tanh,
    # One EUP op instead of exp + divide.
    "sigmoid": lambda x: 0.5 * (jnp.tanh(0.5 * x) + 1.0),
    "identity": lambda x: x,
}


def _round_up(x, m):
    return (x + m - 1) // m * m


def _cdiv(a, b):
    return -(-a // b)


def _choose_batch_tile(batch, batch_tile, min_grid_steps=2):
    """Pick a batch tile that (a) avoids tail-padding waste, (b) gives at
    least `min_grid_steps` grid steps when the batch allows (v7x megacore
    sharding and DMA prefetch/writeback overlap), and (c) prefers multiples of
    256 for large tiles (v6e/v7x MXU geometry) when that doesn't inflate the
    padded batch."""
    n = _cdiv(batch, batch_tile)
    n = max(n, min(min_grid_steps, max(batch // 8, 1)))
    tb = _round_up(_cdiv(batch, n), 8)
    if tb > 256:
        tb256 = _round_up(tb, 256)
        if _round_up(batch, tb256) <= _round_up(batch, tb):
            tb = tb256
    return tb


# ---------------------------------------------------------------------------
# Fused MLP kernel: all layers (matmul + bias + activation) for one batch tile.
# ---------------------------------------------------------------------------
def _decoder_kernel(*refs, n_layers, act_names, out_dim):
    # refs = (z_ref, w0, b0, w1, b1, ..., w_{L-1}, b_{L-1}, out_ref)
    z_ref = refs[0]
    out_ref = refs[-1]
    p = refs[1:-1]

    h = z_ref[...]                                   # bf16 (tb, d_in_pad)
    for li in range(n_layers):                       # static loop: full LLO visibility
        w = p[2 * li][...]                           # bf16 (d_in_pad, d_out_pad)
        b = p[2 * li + 1][...]                       # f32  (1, d_out_pad)
        acc = jnp.dot(h, w, preferred_element_type=jnp.float32) + b
        if li + 1 < n_layers:
            h = _ACTS[act_names[li]](acc).astype(jnp.bfloat16)   # bf16 back into MXU
        else:
            # Drop padded output columns before the store: output array is kept
            # at the TRUE output_dim (narrow, masked store) which minimizes HBM
            # writeback; the dropped columns only ever held zero-weight results.
            acc = _ACTS[act_names[li]](acc[:, :out_dim])
            out_ref[...] = acc.astype(out_ref.dtype)


# ---------------------------------------------------------------------------
# One-time builder: pads/casts parameters and returns a jit-able forward(z).
# ---------------------------------------------------------------------------
def build_decoder(params, act_names, *, batch_tile=512):
    """params: list of (W, b), W:(d_in, d_out), b:(1, d_out) f32 (Linear stored
    so forward is z @ W + b).  act_names: activation per layer."""
    n_layers = len(params)
    act_names = tuple(act_names)
    assert len(act_names) == n_layers

    dims_in = [params[0][0].shape[0]] + [w.shape[1] for w, _ in params[:-1]]
    dims_out = [w.shape[1] for w, _ in params]
    dims_in_p = [_round_up(d, _LANE) for d in dims_in]
    dims_out_p = [_round_up(d, _LANE) for d in dims_out]
    d_in, d_in_p = dims_in[0], dims_in_p[0]
    out_dim = dims_out[-1]
    max_width_p = max(dims_out_p)

    # Pad ONCE (hoisted out of the per-call path).  Correctness invariant:
    # padded weight ROWS are zero, so padded hidden units (e.g. 0.5 after
    # sigmoid on a zero column) are multiplied by zero in the next layer and
    # never reach valid outputs.  Do not change this padding scheme without
    # re-checking that invariant.
    flat_params = []
    for li, (w, b) in enumerate(params):
        assert w.shape == (dims_in[li], dims_out[li])
        wp = jnp.zeros((dims_in_p[li], dims_out_p[li]), jnp.bfloat16)
        wp = wp.at[: w.shape[0], : w.shape[1]].set(w.astype(jnp.bfloat16))
        bp = jnp.zeros((1, dims_out_p[li]), jnp.float32)
        bp = bp.at[:, : b.shape[1]].set(b.astype(jnp.float32))
        flat_params += [wp, bp]

    weight_bytes = sum(int(x.size) * x.dtype.itemsize for x in flat_params)

    # Device VMEM capacity for the budget clamp (v7x: 64 MiB; v5e/v6e: 128 MiB).
    try:
        vmem_cap = int(pltpu.get_tpu_info().vmem_capacity_bytes)
    except Exception:
        vmem_cap = 64 * 1024 * 1024
    # TODO(synk): if weight_bytes exceeds ~half of vmem_cap, switch to an
    # HBM-resident-weight path (BlockSpec(memory_space=pl.ANY) +
    # pltpu.emit_pipeline over the widest layer) instead of all-resident weights.

    kernel = functools.partial(
        _decoder_kernel, n_layers=n_layers, act_names=act_names, out_dim=out_dim
    )

    def forward(z):
        batch, zd = z.shape
        assert zd == d_in, f"expected input_dim={d_in}, got {zd}"

        tb = _choose_batch_tile(batch, batch_tile)
        batch_p = _round_up(batch, tb)
        grid = (batch_p // tb,)

        # Lane-dense z tile (bf16): cheap per-call (batch, d_in_pad) pad; the
        # weights above are NOT rebuilt here.
        zp = jnp.zeros((batch_p, d_in_p), jnp.bfloat16)
        zp = zp.at[:batch, :d_in].set(z.astype(jnp.bfloat16))

        in_specs = [pl.BlockSpec((tb, d_in_p), lambda i: (i, 0))]
        for li in range(n_layers):
            # Grid-invariant blocks (same index every step) -> VMEM-resident,
            # DMA'd from HBM once; single-buffered to halve VMEM footprint.
            in_specs.append(
                pl.BlockSpec((dims_in_p[li], dims_out_p[li]), lambda i: (0, 0),
                             pipeline_mode=pl.Buffered(1))
            )
            in_specs.append(
                pl.BlockSpec((1, dims_out_p[li]), lambda i: (0, 0),
                             pipeline_mode=pl.Buffered(1))
            )
        # Output at the TRUE out_dim (block last dim == full array dim is
        # legal) in bf16 -> minimal writeback bytes and out-tile VMEM.
        out_spec = pl.BlockSpec((tb, out_dim), lambda i: (i, 0))

        # Explicit VMEM budget: resident params (1 buffer each) + double
        # buffered z/out tiles + f32/bf16 intermediates of the widest layer,
        # with headroom; clamped to device capacity.
        tile_bytes = (
            2 * tb * d_in_p * 2            # z tile, double buffered, bf16
            + 2 * tb * out_dim * 2         # out tile, double buffered, bf16
            + tb * max_width_p * (4 + 2)   # f32 acc + bf16 copy of widest layer
        )
        budget = weight_bytes + tile_bytes
        vmem_limit = max(int(1.25 * budget) + (4 << 20), 32 * 1024 * 1024)
        vmem_limit = min(vmem_limit, vmem_cap - (2 << 20))

        flops = 2 * batch_p * sum(a * b for a, b in zip(dims_in_p, dims_out_p))
        transcendentals = batch_p * sum(
            dims_out_p[li] for li in range(n_layers)
            if act_names[li] in ("tanh", "sigmoid")
        )
        bytes_accessed = int(zp.size) * 2 + weight_bytes + batch_p * out_dim * 2

        out_p = pl.pallas_call(
            kernel,
            out_shape=jax.ShapeDtypeStruct((batch_p, out_dim), jnp.bfloat16),
            grid=grid,
            in_specs=in_specs,
            out_specs=out_spec,
            compiler_params=pltpu.CompilerParams(
                dimension_semantics=("parallel",),
                vmem_limit_bytes=vmem_limit,
            ),
            cost_estimate=pl.CostEstimate(
                flops=flops,
                transcendentals=transcendentals,
                bytes_accessed=bytes_accessed,
            ),
        )(zp, *flat_params)

        # Padded batch rows are dropped here; never reuse out_p directly.
        return out_p[:batch].astype(z.dtype)

    return forward


# ---------------------------------------------------------------------------
# Deterministic parameter construction (mirrors nn.Linear default init).
# ---------------------------------------------------------------------------
def make_decoder_params(key, input_dim, seq, output_dim):
    """seq: [[h0, a0], [h1, a1], ...]. Returns (params, act_names)."""
    dims_in = [input_dim] + [h for h, _ in seq]
    dims_out = [h for h, _ in seq] + [output_dim]
    acts = [a for _, a in seq] + ["tanh"]  # final Dense uses 'tanh'

    params = []
    for d_in, d_out in zip(dims_in, dims_out):
        key, kw, kb = jax.random.split(key, 3)
        bound = 1.0 / jnp.sqrt(jnp.float32(d_in))
        w = jax.random.uniform(kw, (d_in, d_out), jnp.float32, -bound, bound)
        b = jax.random.uniform(kb, (1, d_out), jnp.float32, -bound, bound)
        params.append((w, b))
    return params, acts


# Pure-JAX f32 reference for correctness check.
def decoder_ref(z, params, act_names):
    h = z.astype(jnp.float32)
    ref_acts = {**_ACTS, "sigmoid": jax.nn.sigmoid}
    for (w, b), a in zip(params, act_names):
        h = ref_acts[a](h @ w + b)
    return h


if __name__ == "__main__":
    key = jax.random.PRNGKey(0)

    # Small shapes consistent with the module's forward:
    batch, input_dim, output_dim = 8, 16, 16
    seq = [[32, "relu"], [32, "relu"]]

    key, kz = jax.random.split(key)
    z = jax.random.normal(kz, (batch, input_dim), jnp.float32)

    params, act_names = make_decoder_params(key, input_dim, seq, output_dim)

    # One-time build (pads/casts weights once), then jit the forward pass.
    forward = jax.jit(build_decoder(params, act_names))
    out = jax.block_until_ready(forward(z))

    ref = decoder_ref(z, params, act_names)
    assert out.shape == (batch, output_dim)
    assert out.dtype == z.dtype
    # bf16 MXU inputs / bf16 kernel output with f32 accumulation -> small
    # precision delta vs the f32 reference.
    assert jnp.allclose(out, ref, atol=2e-2, rtol=2e-2)

    print("KERNEL_OK")
</pallas_src>

<mosaic_0001>
module attributes {stable_mosaic.version = 11 : i64} {
  func.func @_decoder_kernel(%arg0: i32, %arg1: memref<8x128xbf16, #tpu.memory_space<vmem>>, %arg2: memref<128x128xbf16, #tpu.memory_space<vmem>>, %arg3: memref<1x128xf32, #tpu.memory_space<vmem>>, %arg4: memref<128x128xbf16, #tpu.memory_space<vmem>>, %arg5: memref<1x128xf32, #tpu.memory_space<vmem>>, %arg6: memref<128x128xbf16, #tpu.memory_space<vmem>>, %arg7: memref<1x128xf32, #tpu.memory_space<vmem>>, %arg8: memref<8x16xbf16, #tpu.memory_space<vmem>>) attributes {dimension_semantics = [#tpu.dimension_semantics<parallel>], iteration_bounds = array<i64: 1>, scalar_prefetch = 0 : i64, scratch_operands = 0 : i64, tpu.core_type = #tpu.core_type<tc>, window_params = [{transform_indices = @transform_0, window_bounds = array<i64: 8, 128>}, {pipeline_mode = #tpu.pipeline_mode<synchronous>, transform_indices = @transform_1, window_bounds = array<i64: 128, 128>}, {pipeline_mode = #tpu.pipeline_mode<synchronous>, transform_indices = @transform_2, window_bounds = array<i64: 1, 128>}, {pipeline_mode = #tpu.pipeline_mode<synchronous>, transform_indices = @transform_3, window_bounds = array<i64: 128, 128>}, {pipeline_mode = #tpu.pipeline_mode<synchronous>, transform_indices = @transform_4, window_bounds = array<i64: 1, 128>}, {pipeline_mode = #tpu.pipeline_mode<synchronous>, transform_indices = @transform_5, window_bounds = array<i64: 128, 128>}, {pipeline_mode = #tpu.pipeline_mode<synchronous>, transform_indices = @transform_6, window_bounds = array<i64: 1, 128>}, {transform_indices = @transform_7, window_bounds = array<i64: 8, 16>}]} {
    %c0 = arith.constant 0 : index
    %c0_0 = arith.constant 0 : index
    %0 = vector.load %arg1[%c0, %c0_0] : memref<8x128xbf16, #tpu.memory_space<vmem>>, vector<8x128xbf16>
    %c0_1 = arith.constant 0 : index
    %c0_2 = arith.constant 0 : index
    %1 = vector.load %arg2[%c0_1, %c0_2] : memref<128x128xbf16, #tpu.memory_space<vmem>>, vector<128x128xbf16>
    %c0_3 = arith.constant 0 : index
    %c0_4 = arith.constant 0 : index
    %2 = vector.load %arg3[%c0_3, %c0_4] : memref<1x128xf32, #tpu.memory_space<vmem>>, vector<1x128xf32>
    %cst = arith.constant dense<0.000000e+00> : vector<8x128xf32>
    %3 = tpu.matmul %0, %1, %cst {dimension_numbers = #tpu.dot_dimension_numbers<[1], [0], [0], [1], [0, 0, 1, 1], [], []>} : vector<8x128xbf16>, vector<128x128xbf16>, vector<8x128xf32> -> vector<8x128xf32>
    %4 = vector.broadcast %2 : vector<1x128xf32> to vector<8x128xf32>
    %5 = arith.addf %3, %4 : vector<8x128xf32>
    %cst_5 = arith.constant 0.000000e+00 : f32
    %6 = vector.broadcast %cst_5 : f32 to vector<8x128xf32>
    %7 = arith.maximumf %5, %6 : vector<8x128xf32>
    %8 = arith.truncf %7 : vector<8x128xf32> to vector<8x128xbf16>
    %c0_6 = arith.constant 0 : index
    %c0_7 = arith.constant 0 : index
    %9 = vector.load %arg4[%c0_6, %c0_7] : memref<128x128xbf16, #tpu.memory_space<vmem>>, vector<128x128xbf16>
    %c0_8 = arith.constant 0 : index
    %c0_9 = arith.constant 0 : index
    %10 = vector.load %arg5[%c0_8, %c0_9] : memref<1x128xf32, #tpu.memory_space<vmem>>, vector<1x128xf32>
    %cst_10 = arith.constant dense<0.000000e+00> : vector<8x128xf32>
    %11 = tpu.matmul %8, %9, %cst_10 {dimension_numbers = #tpu.dot_dimension_numbers<[1], [0], [0], [1], [0, 0, 1, 1], [], []>} : vector<8x128xbf16>, vector<128x128xbf16>, vector<8x128xf32> -> vector<8x128xf32>
    %12 = vector.broadcast %10 : vector<1x128xf32> to vector<8x128xf32>
    %13 = arith.addf %11, %12 : vector<8x128xf32>
    %cst_11 = arith.constant 0.000000e+00 : f32
    %14 = vector.broadcast %cst_11 : f32 to vector<8x128xf32>
    %15 = arith.maximumf %13, %14 : vector<8x128xf32>
    %16 = arith.truncf %15 : vector<8x128xf32> to vector<8x128xbf16>
    %c0_12 = arith.constant 0 : index
    %c0_13 = arith.constant 0 : index
    %17 = vector.load %arg6[%c0_12, %c0_13] : memref<128x128xbf16, #tpu.memory_space<vmem>>, vector<128x128xbf16>
    %c0_14 = arith.constant 0 : index
    %c0_15 = arith.constant 0 : index
    %18 = vector.load %arg7[%c0_14, %c0_15] : memref<1x128xf32, #tpu.memory_space<vmem>>, vector<1x128xf32>
    %cst_16 = arith.constant dense<0.000000e+00> : vector<8x128xf32>
    %19 = tpu.matmul %16, %17, %cst_16 {dimension_numbers = #tpu.dot_dimension_numbers<[1], [0], [0], [1], [0, 0, 1, 1], [], []>} : vector<8x128xbf16>, vector<128x128xbf16>, vector<8x128xf32> -> vector<8x128xf32>
    %20 = vector.broadcast %18 : vector<1x128xf32> to vector<8x128xf32>
    %21 = arith.addf %19, %20 : vector<8x128xf32>
    %22 = vector.extract_strided_slice %21 {offsets = [0, 0], sizes = [8, 16], strides = [1, 1]} : vector<8x128xf32> to vector<8x16xf32>
    %23 = math.tanh %22 : vector<8x16xf32>
    %24 = arith.truncf %23 : vector<8x16xf32> to vector<8x16xbf16>
    %c0_17 = arith.constant 0 : index
    %c0_18 = arith.constant 0 : index
    %25 = vector.load %arg8[%c0_17, %c0_18] : memref<8x16xbf16, #tpu.memory_space<vmem>>, vector<8x16xbf16>
    tpu.vector_store %arg8[%c0_17, %c0_18], %24 {strides = array<i32>} : memref<8x16xbf16, #tpu.memory_space<vmem>>, vector<8x16xbf16>,
    return
  }
  func.func @transform_0(%arg0: i32) -> (i32, i32) {
    %c0_i32 = arith.constant 0 : i32
    %c0_i32_0 = arith.constant 0 : i32
    return %arg0, %c0_i32 : i32, i32
  }
  func.func @transform_1(%arg0: i32) -> (i32, i32) {
    %c0_i32 = arith.constant 0 : i32
    %c0_i32_0 = arith.constant 0 : i32
    %c0_i32_1 = arith.constant 0 : i32
    return %c0_i32, %c0_i32_0 : i32, i32
  }
  func.func @transform_2(%arg0: i32) -> (i32, i32) {
    %c0_i32 = arith.constant 0 : i32
    %c0_i32_0 = arith.constant 0 : i32
    %c0_i32_1 = arith.constant 0 : i32
    return %c0_i32, %c0_i32_0 : i32, i32
  }
  func.func @transform_3(%arg0: i32) -> (i32, i32) {
    %c0_i32 = arith.constant 0 : i32
    %c0_i32_0 = arith.constant 0 : i32
    %c0_i32_1 = arith.constant 0 : i32
    return %c0_i32, %c0_i32_0 : i32, i32
  }
  func.func @transform_4(%arg0: i32) -> (i32, i32) {
    %c0_i32 = arith.constant 0 : i32
    %c0_i32_0 = arith.constant 0 : i32
    %c0_i32_1 = arith.constant 0 : i32
    return %c0_i32, %c0_i32_0 : i32, i32
  }
  func.func @transform_5(%arg0: i32) -> (i32, i32) {
    %c0_i32 = arith.constant 0 : i32
    %c0_i32_0 = arith.constant 0 : i32
    %c0_i32_1 = arith.constant 0 : i32
    return %c0_i32, %c0_i32_0 : i32, i32
  }
  func.func @transform_6(%arg0: i32) -> (i32, i32) {
    %c0_i32 = arith.constant 0 : i32
    %c0_i32_0 = arith.constant 0 : i32
    %c0_i32_1 = arith.constant 0 : i32
    return %c0_i32, %c0_i32_0 : i32, i32
  }
  func.func @transform_7(%arg0: i32) -> (i32, i32) {
    %c0_i32 = arith.constant 0 : i32
    %c0_i32_0 = arith.constant 0 : i32
    return %arg0, %c0_i32 : i32, i32
  }
}

</mosaic_0001>

<llo_original>
// kernel: forward.1
$region0: #{forward.1}
  #allocation0 [shape = 'u32[]', space=smem, size = 0x4, offset = 0x4, fixed_abs, tag = 'smem constant byte address 0x4 - core index']
  #allocation1 [shape = 'u32[144,128]{1,0:T(1,128)}', space=vmem, size = 0x12000, scoped, tag = 'internal scratch']
  %s0 = inlined_call_operand.vmem [shape: bf16[8,128], index: 0, kind: input, shape index: {}]
  %s1 = inlined_call_operand.hbm [shape: bf16[128,128], index: 1, kind: input, shape index: {}]
  %s2 = inlined_call_operand.vmem [shape: f32[1,128], index: 2, kind: input, shape index: {}]
  %s3 = inlined_call_operand.hbm [shape: bf16[128,128], index: 3, kind: input, shape index: {}]
  %s4 = inlined_call_operand.vmem [shape: f32[1,128], index: 4, kind: input, shape index: {}]
  %s5 = inlined_call_operand.hbm [shape: bf16[128,128], index: 5, kind: input, shape index: {}]
  %s6 = inlined_call_operand.vmem [shape: f32[1,128], index: 6, kind: input, shape index: {}]
  %s7 = inlined_call_operand.vmem [shape: bf16[8,16], index: 7, kind: output, shape index: {}]
  %s8 = sld [smem:[#allocation0]]
  $region50: #{forward.1} parent=0
    _
  %s10 = ssub.s32 1, %s8
  %s11 = scalar_select 0, %s10, %s8
  $region1: #{forward.1} parent=0
    #allocation2 [shape = 'u8[32768]{0}', space=vmem, size = 0x8000, scoped, tag = 'input window, operand 1, single buffered']
    #allocation3 [shape = 's32[1]{0}', space=sflag, size = 0x4, scoped, tag = 'scoped memory for forward.1']
    #allocation4 [shape = 'u8[32768]{0}', space=vmem, size = 0x8000, scoped, tag = 'input window, operand 3, single buffered']
    #allocation5 [shape = 's32[1]{0}', space=sflag, size = 0x4, scoped, tag = 'scoped memory for forward.1']
    #allocation6 [shape = 'u8[32768]{0}', space=vmem, size = 0x8000, scoped, tag = 'input window, operand 5, single buffered']
    %12 = vsyncpa [#allocation3], 0
    %13 = vsyncpa [#allocation5], 0
    // Predicated region
    $region2: #{forward.1} parent=1 // pred_check
      _
    $region3: #{forward.1} parent=1 // pred_check_branch
      %15 = sbr.rel (0) target = $region5
    $region4: #{forward.1} parent=1 // pred_region
      _
    $region5: #{forward.1} parent=1 // pred_fallthru
      _
    // Predicated region
    $region6: #{forward.1} parent=1 // pred_check
      _
    $region7: #{forward.1} parent=1 // pred_check_branch
      %17 = sbr.rel (0) target = $region9
    $region8: #{forward.1} parent=1 // pred_region
      %s19 = ssub.s32 1024, 1024
      %20 = vsyncadd [#allocation3], %s19
      %s21 = sshll.u32 [#allocation2], 4
      %s22 = int_to_ptr.vmem [resolvable:$true] %s21
      %27 = dma.hbm_to_vmem [thread:$0]  %s1, 1024, %s22, [#allocation3], 64, 64, 4
    $region9: #{forward.1} parent=1 // pred_fallthru
      _
    // Predicated region
    $region10: #{forward.1} parent=1 // pred_check
      _
    $region11: #{forward.1} parent=1 // pred_check_branch
      %29 = sbr.rel (0) target = $region13
    $region12: #{forward.1} parent=1 // pred_region
      _
    $region13: #{forward.1} parent=1 // pred_fallthru
      _
    // Predicated region
    $region14: #{forward.1} parent=1 // pred_check
      _
    $region15: #{forward.1} parent=1 // pred_check_branch
      %31 = sbr.rel (0) target = $region17
    $region16: #{forward.1} parent=1 // pred_region
      %s33 = ssub.s32 1024, 1024
      %34 = vsyncadd [#allocation5], %s33
      %s35 = sshll.u32 [#allocation4], 4
      %s36 = int_to_ptr.vmem [resolvable:$true] %s35
      %41 = dma.hbm_to_vmem [thread:$0]  %s3, 1024, %s36, [#allocation5], 64, 64, 4
    $region17: #{forward.1} parent=1 // pred_fallthru
      _
    // Predicated region
    $region18: #{forward.1} parent=1 // pred_check
      _
    $region19: #{forward.1} parent=1 // pred_check_branch
      %43 = sbr.rel (0) target = $region21
    $region20: #{forward.1} parent=1 // pred_region
      _
    $region21: #{forward.1} parent=1 // pred_fallthru
      _
    // Predicated region
    $region22: #{forward.1} parent=1 // pred_check
      _
    $region23: #{forward.1} parent=1 // pred_check_branch
      %45 = sbr.rel (0) target = $region25
    $region24: #{forward.1} parent=1 // pred_region
      %s47 = ssub.s32 1024, 1024
      %48 = vsyncadd [#allocation5], %s47
      %s49 = sshll.u32 [#allocation6], 4
      %s50 = int_to_ptr.vmem [resolvable:$true] %s49
      %55 = dma.hbm_to_vmem [thread:$0]  %s5, 1024, %s50, [#allocation5], 64, 64, 4
    $region25: #{forward.1} parent=1 // pred_fallthru
      _
    // Predicated region
    $region26: #{forward.1} parent=1 // pred_check
      _
    $region27: #{forward.1} parent=1 // pred_check_branch
      %57 = sbr.rel (0) target = $region29
    $region28: #{forward.1} parent=1 // pred_region
      _
    $region29: #{forward.1} parent=1 // pred_fallthru
      _
    // Predicated region
    $region30: #{forward.1} parent=1 // pred_check
      _
    $region31: #{forward.1} parent=1 // pred_check_branch
      %59 = sbr.rel (0) target = $region33
    $region32: #{forward.1} parent=1 // pred_region
      %60 = dma.done [#allocation3], 1024
    $region33: #{forward.1} parent=1 // pred_fallthru
      _
    // Predicated region
    $region34: #{forward.1} parent=1 // pred_check
      _
    $region35: #{forward.1} parent=1 // pred_check_branch
      %62 = sbr.rel (0) target = $region37
    $region36: #{forward.1} parent=1 // pred_region
      %63 = dma.done [#allocation5], 1024
    $region37: #{forward.1} parent=1 // pred_fallthru
      _
    // Predicated region
    $region38: #{forward.1} parent=1 // pred_check
      _
    $region39: #{forward.1} parent=1 // pred_check_branch
      %65 = sbr.rel (0) target = $region41
    $region40: #{forward.1} parent=1 // pred_region
      %66 = dma.done [#allocation5], 1024
    $region41: #{forward.1} parent=1 // pred_fallthru
      _
    %v68 = vld [vmem:[%s0] sm:$0xf]
    %v69 = vld [vmem:[#allocation2] sm:$0xf]
    %v70 = vld [vmem:[#allocation2 + $0x4] sm:$0xf]
    %v71 = vld [vmem:[#allocation2 + $0x8] sm:$0xf]
    %v72 = vld [vmem:[#allocation2 + $0xc] sm:$0xf]
    %v73 = vld [vmem:[#allocation2 + $0x10] sm:$0xf]
    %v74 = vld [vmem:[#allocation2 + $0x14] sm:$0xf]
    %v75 = vld [vmem:[#allocation2 + $0x18] sm:$0xf]
    %v76 = vld [vmem:[#allocation2 + $0x1c] sm:$0xf]
    %v77 = vld [vmem:[#allocation2 + $0x20] sm:$0xf]
    %v78 = vld [vmem:[#allocation2 + $0x24] sm:$0xf]
    %v79 = vld [vmem:[#allocation2 + $0x28] sm:$0xf]
    %v80 = vld [vmem:[#allocation2 + $0x2c] sm:$0xf]
    %v81 = vld [vmem:[#allocation2 + $0x30] sm:$0xf]
    %v82 = vld [vmem:[#allocation2 + $0x34] sm:$0xf]
    %v83 = vld [vmem:[#allocation2 + $0x38] sm:$0xf]
    %v84 = vld [vmem:[#allocation2 + $0x3c] sm:$0xf]
    %v85 = vld [vmem:[%s2] sm:$0x1]
    %v87 = vlaneseq
    %v88 = vshrl.u32 %v87, 7
    %v89 = vsub.s32 0, %v88
    %v90 = vrot.slane %v85, %v89
    %v108 = vunpack.c.l.b16 %v69
    %v109 = vunpack.c.l.b16 %v70
    %v110 = vunpack.c.l.b16 %v71
    %v111 = vunpack.c.l.b16 %v72
    %v112 = vunpack.c.l.b16 %v73
    %v113 = vunpack.c.l.b16 %v74
    %v114 = vunpack.c.l.b16 %v75
    %v115 = vunpack.c.l.b16 %v76
    %v116 = vunpack.c.l.b16 %v77
    %v117 = vunpack.c.l.b16 %v78
    %v118 = vunpack.c.l.b16 %v79
    %v119 = vunpack.c.l.b16 %v80
    %v120 = vunpack.c.l.b16 %v81
    %v121 = vunpack.c.l.b16 %v82
    %v122 = vunpack.c.l.b16 %v83
    %v123 = vunpack.c.l.b16 %v84
    %v124 = vpack.c.b16 %v109, %v108
    %v125 = vpack.c.b16 %v111, %v110
    %v126 = vpack.c.b16 %v113, %v112
    %v127 = vpack.c.b16 %v115, %v114
    %v128 = vpack.c.b16 %v117, %v116
    %v129 = vpack.c.b16 %v119, %v118
    %v130 = vpack.c.b16 %v121, %v120
    %v131 = vpack.c.b16 %v123, %v122
    %140 = vmatprep.subr.bf16.mxu0 0
    %141 = vmatpush1.bf16.msra.mxu0 %v124
    %142 = vmatprep.subr.bf16.mxu0 0
    %143 = vmatpush1.bf16.msra.mxu0 %v125
    %144 = vmatprep.subr.bf16.mxu0 0
    %145 = vmatpush1.bf16.msra.mxu0 %v126
    %146 = vmatprep.subr.bf16.mxu0 0
    %147 = vmatpush1.bf16.msra.mxu0 %v127
    %148 = vmatprep.subr.bf16.mxu0 0
    %149 = vmatpush1.bf16.msra.mxu0 %v128
    %150 = vmatprep.subr.bf16.mxu0 0
    %151 = vmatpush1.bf16.msra.mxu0 %v129
    %152 = vmatprep.subr.bf16.mxu0 0
    %153 = vmatpush1.bf16.msra.mxu0 %v130
    %154 = vmatprep.subr.bf16.mxu0 0
    %155 = vmatpush1.bf16.msra.mxu0 %v131
    %156 = vmatprep.subr.bf16.mxu0 0
    %157 = vmatpush1.bf16.msra.mxu0 0
    %158 = vmatprep.subr.bf16.mxu0 0
    %159 = vmatpush1.bf16.msra.mxu0 0
    %160 = vmatprep.subr.bf16.mxu0 0
    %161 = vmatpush1.bf16.msra.mxu0 0
    %162 = vmatprep.subr.bf16.mxu0 0
    %163 = vmatpush1.bf16.msra.mxu0 0
    %164 = vmatprep.subr.bf16.mxu0 0
    %165 = vmatpush1.bf16.msra.mxu0 0
    %166 = vmatprep.subr.bf16.mxu0 0
    %167 = vmatpush1.bf16.msra.mxu0 0
    %168 = vmatprep.subr.bf16.mxu0 0
    %169 = vmatpush1.bf16.msra.mxu0 0
    %170 = vmatprep.subr.bf16.mxu0 0
    %171 = vmatpush1.bf16.msra.mxu0 0
    %172 = vmatprep.mubr.bf16.mxu0 0
    %173 = vmatmul.mubr.bf16.gmra.mrb[0].mxu0 %v68
    %v174 = vpop.f32.mrb[0].mxu0
    %v175 = vadd.f32 %v90, %v174
    %v176 = vpop.f32.mrb[0].mxu0
    %v177 = vpop.f32.mrb[0].mxu0
    %v178 = vpop.f32.mrb[0].mxu0
    %179 = vdwg.mxu0
    %v180 = vmax.f32 %v175, 0.0
    %v181 = vpack.c.bf16 %v180, %v180
    %v182 = vld [vmem:[#allocation4] sm:$0xf]
    %v183 = vld [vmem:[#allocation4 + $0x4] sm:$0xf]
    %v184 = vld [vmem:[#allocation4 + $0x8] sm:$0xf]
    %v185 = vld [vmem:[#allocation4 + $0xc] sm:$0xf]
    %v186 = vld [vmem:[#allocation4 + $0x10] sm:$0xf]
    %v187 = vld [vmem:[#allocation4 + $0x14] sm:$0xf]
    %v188 = vld [vmem:[#allocation4 + $0x18] sm:$0xf]
    %v189 = vld [vmem:[#allocation4 + $0x1c] sm:$0xf]
    %v190 = vld [vmem:[#allocation4 + $0x20] sm:$0xf]
    %v191 = vld [vmem:[#allocation4 + $0x24] sm:$0xf]
    %v192 = vld [vmem:[#allocation4 + $0x28] sm:$0xf]
    %v193 = vld [vmem:[#allocation4 + $0x2c] sm:$0xf]
    %v194 = vld [vmem:[#allocation4 + $0x30] sm:$0xf]
    %v195 = vld [vmem:[#allocation4 + $0x34] sm:$0xf]
    %v196 = vld [vmem:[#allocation4 + $0x38] sm:$0xf]
    %v197 = vld [vmem:[#allocation4 + $0x3c] sm:$0xf]
    %v198 = vld [vmem:[%s4] sm:$0x1]
    %v200 = vlaneseq
    %v201 = vshrl.u32 %v200, 7
    %v202 = vsub.s32 0, %v201
    %v203 = vrot.slane %v198, %v202
    %v221 = vunpack.c.l.b16 %v182
    %v222 = vunpack.c.l.b16 %v183
    %v223 = vunpack.c.l.b16 %v184
    %v224 = vunpack.c.l.b16 %v185
    %v225 = vunpack.c.l.b16 %v186
    %v226 = vunpack.c.l.b16 %v187
    %v227 = vunpack.c.l.b16 %v188
    %v228 = vunpack.c.l.b16 %v189
    %v229 = vunpack.c.l.b16 %v190
    %v230 = vunpack.c.l.b16 %v191
    %v231 = vunpack.c.l.b16 %v192
    %v232 = vunpack.c.l.b16 %v193
    %v233 = vunpack.c.l.b16 %v194
    %v234 = vunpack.c.l.b16 %v195
    %v235 = vunpack.c.l.b16 %v196
    %v236 = vunpack.c.l.b16 %v197
    %v237 = vpack.c.b16 %v222, %v221
    %v238 = vpack.c.b16 %v224, %v223
    %v239 = vpack.c.b16 %v226, %v225
    %v240 = vpack.c.b16 %v228, %v227
    %v241 = vpack.c.b16 %v230, %v229
    %v242 = vpack.c.b16 %v232, %v231
    %v243 = vpack.c.b16 %v234, %v233
    %v244 = vpack.c.b16 %v236, %v235
    %253 = vmatprep.subr.bf16.mxu0 0
    %254 = vmatpush1.bf16.msra.mxu0 %v237
    %255 = vmatprep.subr.bf16.mxu0 0
    %256 = vmatpush1.bf16.msra.mxu0 %v238
    %257 = vmatprep.subr.bf16.mxu0 0
    %258 = vmatpush1.bf16.msra.mxu0 %v239
    %259 = vmatprep.subr.bf16.mxu0 0
    %260 = vmatpush1.bf16.msra.mxu0 %v240
    %261 = vmatprep.subr.bf16.mxu0 0
    %262 = vmatpush1.bf16.msra.mxu0 %v241
    %263 = vmatprep.subr.bf16.mxu0 0
    %264 = vmatpush1.bf16.msra.mxu0 %v242
    %265 = vmatprep.subr.bf16.mxu0 0
    %266 = vmatpush1.bf16.msra.mxu0 %v243
    %267 = vmatprep.subr.bf16.mxu0 0
    %268 = vmatpush1.bf16.msra.mxu0 %v244
    %269 = vmatprep.subr.bf16.mxu0 0
    %270 = vmatpush1.bf16.msra.mxu0 0
    %271 = vmatprep.subr.bf16.mxu0 0
    %272 = vmatpush1.bf16.msra.mxu0 0
    %273 = vmatprep.subr.bf16.mxu0 0
    %274 = vmatpush1.bf16.msra.mxu0 0
    %275 = vmatprep.subr.bf16.mxu0 0
    %276 = vmatpush1.bf16.msra.mxu0 0
    %277 = vmatprep.subr.bf16.mxu0 0
    %278 = vmatpush1.bf16.msra.mxu0 0
    %279 = vmatprep.subr.bf16.mxu0 0
    %280 = vmatpush1.bf16.msra.mxu0 0
    %281 = vmatprep.subr.bf16.mxu0 0
    %282 = vmatpush1.bf16.msra.mxu0 0
    %283 = vmatprep.subr.bf16.mxu0 0
    %284 = vmatpush1.bf16.msra.mxu0 0
    %285 = vmatprep.mubr.bf16.mxu0 0
    %286 = vmatmul.mubr.bf16.gmra.mrb[0].mxu0 %v181
    %v287 = vpop.f32.mrb[0].mxu0
    %v288 = vadd.f32 %v203, %v287
    %v289 = vpop.f32.mrb[0].mxu0
    %v290 = vpop.f32.mrb[0].mxu0
    %v291 = vpop.f32.mrb[0].mxu0
    %292 = vdwg.mxu0
    %v293 = vmax.f32 %v288, 0.0
    %v294 = vpack.c.bf16 %v293, %v293
    %v295 = vld [vmem:[#allocation6] sm:$0xf]
    %v296 = vld [vmem:[#allocation6 + $0x4] sm:$0xf]
    %v297 = vld [vmem:[#allocation6 + $0x8] sm:$0xf]
    %v298 = vld [vmem:[#allocation6 + $0xc] sm:$0xf]
    %v299 = vld [vmem:[#allocation6 + $0x10] sm:$0xf]
    %v300 = vld [vmem:[#allocation6 + $0x14] sm:$0xf]
    %v301 = vld [vmem:[#allocation6 + $0x18] sm:$0xf]
    %v302 = vld [vmem:[#allocation6 + $0x1c] sm:$0xf]
    %v303 = vld [vmem:[#allocation6 + $0x20] sm:$0xf]
    %v304 = vld [vmem:[#allocation6 + $0x24] sm:$0xf]
    %v305 = vld [vmem:[#allocation6 + $0x28] sm:$0xf]
    %v306 = vld [vmem:[#allocation6 + $0x2c] sm:$0xf]
    %v307 = vld [vmem:[#allocation6 + $0x30] sm:$0xf]
    %v308 = vld [vmem:[#allocation6 + $0x34] sm:$0xf]
    %v309 = vld [vmem:[#allocation6 + $0x38] sm:$0xf]
    %v310 = vld [vmem:[#allocation6 + $0x3c] sm:$0xf]
    %v311 = vld [vmem:[%s6] sm:$0x1]
    %v313 = vlaneseq
    %v314 = vshrl.u32 %v313, 7
    %v315 = vsub.s32 0, %v314
    %v316 = vrot.slane %v311, %v315
    %v334 = vunpack.c.l.b16 %v295
    %v335 = vunpack.c.l.b16 %v296
    %v336 = vunpack.c.l.b16 %v297
    %v337 = vunpack.c.l.b16 %v298
    %v338 = vunpack.c.l.b16 %v299
    %v339 = vunpack.c.l.b16 %v300
    %v340 = vunpack.c.l.b16 %v301
    %v341 = vunpack.c.l.b16 %v302
    %v342 = vunpack.c.l.b16 %v303
    %v343 = vunpack.c.l.b16 %v304
    %v344 = vunpack.c.l.b16 %v305
    %v345 = vunpack.c.l.b16 %v306
    %v346 = vunpack.c.l.b16 %v307
    %v347 = vunpack.c.l.b16 %v308
    %v348 = vunpack.c.l.b16 %v309
    %v349 = vunpack.c.l.b16 %v310
    %v350 = vpack.c.b16 %v335, %v334
    %v351 = vpack.c.b16 %v337, %v336
    %v352 = vpack.c.b16 %v339, %v338
    %v353 = vpack.c.b16 %v341, %v340
    %v354 = vpack.c.b16 %v343, %v342
    %v355 = vpack.c.b16 %v345, %v344
    %v356 = vpack.c.b16 %v347, %v346
    %v357 = vpack.c.b16 %v349, %v348
    %366 = vmatprep.subr.bf16.mxu0 0
    %367 = vmatpush1.bf16.msra.mxu0 %v350
    %368 = vmatprep.subr.bf16.mxu0 0
    %369 = vmatpush1.bf16.msra.mxu0 %v351
    %370 = vmatprep.subr.bf16.mxu0 0
    %371 = vmatpush1.bf16.msra.mxu0 %v352
    %372 = vmatprep.subr.bf16.mxu0 0
    %373 = vmatpush1.bf16.msra.mxu0 %v353
    %374 = vmatprep.subr.bf16.mxu0 0
    %375 = vmatpush1.bf16.msra.mxu0 %v354
    %376 = vmatprep.subr.bf16.mxu0 0
    %377 = vmatpush1.bf16.msra.mxu0 %v355
    %378 = vmatprep.subr.bf16.mxu0 0
    %379 = vmatpush1.bf16.msra.mxu0 %v356
    %380 = vmatprep.subr.bf16.mxu0 0
    %381 = vmatpush1.bf16.msra.mxu0 %v357
    %382 = vmatprep.subr.bf16.mxu0 0
    %383 = vmatpush1.bf16.msra.mxu0 0
    %384 = vmatprep.subr.bf16.mxu0 0
    %385 = vmatpush1.bf16.msra.mxu0 0
    %386 = vmatprep.subr.bf16.mxu0 0
    %387 = vmatpush1.bf16.msra.mxu0 0
    %388 = vmatprep.subr.bf16.mxu0 0
    %389 = vmatpush1.bf16.msra.mxu0 0
    %390 = vmatprep.subr.bf16.mxu0 0
    %391 = vmatpush1.bf16.msra.mxu0 0
    %392 = vmatprep.subr.bf16.mxu0 0
    %393 = vmatpush1.bf16.msra.mxu0 0
    %394 = vmatprep.subr.bf16.mxu0 0
    %395 = vmatpush1.bf16.msra.mxu0 0
    %396 = vmatprep.subr.bf16.mxu0 0
    %397 = vmatpush1.bf16.msra.mxu0 0
    %398 = vmatprep.mubr.bf16.mxu0 0
    %399 = vmatmul.mubr.bf16.gmra.mrb[0].mxu0 %v294
    %v400 = vpop.f32.mrb[0].mxu0
    %v401 = vadd.f32 %v316, %v400
    %v402 = vpop.f32.mrb[0].mxu0
    %v403 = vpop.f32.mrb[0].mxu0
    %v404 = vpop.f32.mrb[0].mxu0
    %405 = vdwg.mxu0
    %v406 = vtanh.pop %v401
    %v407 = vpack.c.bf16 %v406, %v406
    %vm408 = vcmask 125952
    %409 = vst.msk [vmem:[%s7] sm:$0xf] %vm408, %v407
    // Predicated region
    $region42: #{forward.1} parent=1 // pred_check
      _
    $region43: #{forward.1} parent=1 // pred_check_branch
      %411 = sbr.rel (0) target = $region45
    $region44: #{forward.1} parent=1 // pred_region
      _
    $region45: #{forward.1} parent=1 // pred_fallthru
      _
    // Predicated region
    $region46: #{forward.1} parent=1 // pred_check
      _
    $region47: #{forward.1} parent=1 // pred_check_branch
      %413 = sbr.rel (0) target = $region49
    $region48: #{forward.1} parent=1 // pred_region
      _
    $region49: #{forward.1} parent=1 // pred_fallthru
      _
    %414 = vsyncpa [#allocation3], 1
    %415 = vsyncpa [#allocation5], 1

</llo_original>
